<compile_context>
chip_gen: v6e
topology: v6e:2x2x1
jax: 0.10.0
libtpu: 0.0.40
codegen_flags: <defaults>
</compile_context>

<pallas_src>
import numpy as np
import jax
import jax.numpy as jnp
from jax.experimental import pallas as pl
from jax.experimental.pallas import tpu as pltpu


# ----------------------------------------------------------------------------
# Pallas kernel: the whole serial LSTM recurrence for one batch tile.
# Per step only the truly recurrent work remains on the critical path:
#     gates = h @ W_hh_scaled + pre_gates[t]      (pre_gates precomputed outside)
#     one tanh over the full 4H-lane vreg, gate combine, c/h update.
# ----------------------------------------------------------------------------
def _lstm_recurrence_kernel(pre_ref,    # (T, TB, 4H) precomputed, column-scaled
                            h0_ref,     # (TB, H)     init_project(init_hidden)
                            w_hh_ref,   # (H, 4H)     recurrent weights, column-scaled
                            hid_ref):   # out (T, TB, H)
    H = h0_ref.shape[-1]
    T = pre_ref.shape[0]

    w_hh = w_hh_ref[...]                # hoist: loaded once, lives in vregs

    def step(t, carry):
        h, c = carry
        # Single MXU push per step on the serial critical path.
        gates = jnp.dot(h, w_hh, preferred_element_type=jnp.float32) + pre_ref[t]
        # One EUP push for ALL gate nonlinearities (columns pre-scaled in the
        # wrapper so sigmoid(x) == 0.5*tanh_lane + 0.5 on i/f/o, tanh(x) on g).
        t_all = jnp.tanh(gates)
        i_g = 0.5 * t_all[:, 0 * H:1 * H] + 0.5
        f_g = 0.5 * t_all[:, 1 * H:2 * H] + 0.5
        g_g = t_all[:, 2 * H:3 * H]
        o_g = 0.5 * t_all[:, 3 * H:4 * H] + 0.5
        c_new = f_g * c + i_g * g_g
        h_new = o_g * jnp.tanh(c_new)
        hid_ref[t] = h_new              # not on the recurrence data chain
        return (h_new, c_new)

    h0 = h0_ref[...]
    c0 = jnp.zeros_like(h0)
    # Short static trip count here: fully unroll for LLO scheduler visibility.
    jax.lax.fori_loop(0, T, step, (h0, c0), unroll=(True if T <= 16 else 8))


def decoder_forward_pallas(enc_repr, labels, params, num_labels, hidden_size):
    """
    enc_repr: (B, max_len + 2, D) float32  (encoder output)
    labels:   list of python int lists (ragged)
    Returns (logits (B*max_len, num_labels), flat_labels (B*max_len,), valid_flag)
    """
    B, T2, D = enc_repr.shape
    lens = [len(l) for l in labels]
    max_len = max(lens)
    assert T2 == max_len + 2
    go_idx = num_labels
    NL1 = num_labels + 1
    NL = num_labels
    H = hidden_size
    T = max_len

    # ---- glue: padded labels + teacher-forced previous-token ids (time-major) --
    labels_np = np.full((B, T), go_idx, dtype=np.int32)
    for i, l in enumerate(labels):
        labels_np[i, :len(l)] = np.asarray(l, dtype=np.int32)
    labels_tensor = jnp.asarray(labels_np)                            # (B, T)
    forced_t = jnp.concatenate(
        [jnp.full((1, B), go_idx, dtype=jnp.int32),
         jnp.transpose(labels_tensor)[:T - 1, :]], axis=0)            # (T, B)

    # ---- column scale folding sigmoid -> tanh (i/f/o cols * 0.5, g cols * 1) --
    col_scale_np = np.ones((4 * H,), dtype=np.float32)
    col_scale_np[0:2 * H] = 0.5
    col_scale_np[3 * H:4 * H] = 0.5
    col_scale = jnp.asarray(col_scale_np)

    # ---- parameter plumbing (transposed for right-multiply) -------------------
    w_ih_t = params["w_ih"].T                   # (NL1 + D, 4H)
    w_ih_oh = w_ih_t[:NL1, :]                   # (NL1, 4H)  one-hot part -> gather
    w_ih_enc = w_ih_t[NL1:, :]                  # (D, 4H)
    b_gates = params["b_ih"] + params["b_hh"]   # (4H,)
    w_hh_s = params["w_hh"].T * col_scale       # (H, 4H)  column-scaled

    # ---- hoisted, non-recurrent compute (plain XLA, MXU-efficient) ------------
    # Built directly time-major: transpose the narrow D-wide slice, not the
    # 4H-wide result.
    enc_steps_t = jnp.transpose(enc_repr[:, 1:T + 1, :], (1, 0, 2))   # (T, B, D)
    pre_enc = (enc_steps_t.reshape(T * B, D) @ w_ih_enc).reshape(T, B, 4 * H)
    pre_gates = (pre_enc + w_ih_oh[forced_t] + b_gates) * col_scale   # (T, B, 4H)

    init_hidden = enc_repr[jnp.arange(B), jnp.asarray(lens) + 1, :]   # (B, D)
    h0 = init_hidden @ params["init_w"].T + params["init_b"]          # (B, H)

    # ---- pad batch to a multiple of 8 sublanes; single program on 1-TC chips --
    B_pad = ((B + 7) // 8) * 8
    pre_gates = jnp.pad(pre_gates, ((0, 0), (0, B_pad - B), (0, 0)))  # zero pad
    h0 = jnp.pad(h0, ((0, B_pad - B), (0, 0)))
    num_b = 1                        # see TODO(synk) above for v7x 2-TC split
    TB = B_pad // num_b

    grid_spec = pltpu.PrefetchScalarGridSpec(
        num_scalar_prefetch=0,
        grid=(num_b,),
        in_specs=[
            pl.BlockSpec((T, TB, 4 * H), lambda b: (0, b, 0)),   # pre_gates
            pl.BlockSpec((TB, H), lambda b: (b, 0)),             # h0
            pl.BlockSpec((H, 4 * H), lambda b: (0, 0)),          # w_hh (scaled)
        ],
        out_specs=pl.BlockSpec((T, TB, H), lambda b: (0, b, 0)),
    )

    hiddens = pl.pallas_call(
        _lstm_recurrence_kernel,
        out_shape=jax.ShapeDtypeStruct((T, B_pad, H), jnp.float32),
        grid_spec=grid_spec,
        compiler_params=pltpu.CompilerParams(
            dimension_semantics=("parallel",)),   # independent batch tiles
    )(pre_gates, h0, w_hh_s)

    # ---- hoisted output projection; transpose only the narrow NL-wide logits --
    hid = hiddens[:, :B, :].reshape(T * B, H)
    logits_tb = hid @ params["out_w"].T + params["out_b"]             # (T*B, NL)
    logits = jnp.transpose(logits_tb.reshape(T, B, NL), (1, 0, 2)).reshape(B * T, NL)

    flat_labels = labels_tensor.reshape(-1)
    valid_flag = flat_labels != go_idx
    return logits, flat_labels, valid_flag


# ----------------------------------------------------------------------------
# Pure-JAX reference (mirrors the PyTorch forward) for correctness checking.
# ----------------------------------------------------------------------------
def decoder_forward_ref(enc_repr, labels, params, num_labels, hidden_size):
    B, T2, D = enc_repr.shape
    lens = [len(l) for l in labels]
    max_len = max(lens)
    go_idx = num_labels
    NL1 = num_labels + 1
    H = hidden_size

    labels_np = np.full((B, max_len), go_idx, dtype=np.int32)
    for i, l in enumerate(labels):
        labels_np[i, :len(l)] = np.asarray(l, dtype=np.int32)
    labels_tensor = jnp.asarray(labels_np)

    init_hidden = enc_repr[jnp.arange(B), jnp.asarray(lens) + 1, :]
    hidden = init_hidden @ params["init_w"].T + params["init_b"]
    cell = jnp.zeros((B, H), jnp.float32)

    all_h = []
    for i in range(max_len):
        forced = (jnp.full((B,), go_idx, jnp.int32) if i == 0
                  else labels_tensor[:, i - 1])
        oh = jax.nn.one_hot(forced, NL1, dtype=jnp.float32)
        x = jnp.concatenate([oh, enc_repr[:, i + 1, :]], axis=1)
        gates = (x @ params["w_ih"].T + params["b_ih"]
                 + hidden @ params["w_hh"].T + params["b_hh"])
        i_g = jax.nn.sigmoid(gates[:, 0 * H:1 * H])
        f_g = jax.nn.sigmoid(gates[:, 1 * H:2 * H])
        g_g = jnp.tanh(gates[:, 2 * H:3 * H])
        o_g = jax.nn.sigmoid(gates[:, 3 * H:4 * H])
        cell = f_g * cell + i_g * g_g
        hidden = o_g * jnp.tanh(cell)
        all_h.append(hidden)
    all_h = jnp.stack(all_h, axis=1).reshape(-1, H)
    logits = all_h @ params["out_w"].T + params["out_b"]
    flat_labels = labels_tensor.reshape(-1)
    return logits, flat_labels, flat_labels != go_idx


# ----------------------------------------------------------------------------
def init_params(key, num_labels, enc_repr_dim, hidden_size):
    """Deterministic synthetic params matching nn.Linear / nn.LSTMCell shapes."""
    D, H, NL = enc_repr_dim, hidden_size, num_labels
    in_lstm = NL + 1 + D
    ks = jax.random.split(key, 8)
    u = lambda k, shape, bound: jax.random.uniform(
        k, shape, jnp.float32, -bound, bound)
    return {
        "init_w": u(ks[0], (H, D), 1.0 / np.sqrt(D)),
        "init_b": u(ks[1], (H,), 1.0 / np.sqrt(D)),
        "w_ih":   u(ks[2], (4 * H, in_lstm), 1.0 / np.sqrt(H)),
        "w_hh":   u(ks[3], (4 * H, H), 1.0 / np.sqrt(H)),
        "b_ih":   u(ks[4], (4 * H,), 1.0 / np.sqrt(H)),
        "b_hh":   u(ks[5], (4 * H,), 1.0 / np.sqrt(H)),
        "out_w":  u(ks[6], (NL, H), 1.0 / np.sqrt(H)),
        "out_b":  u(ks[7], (NL,), 1.0 / np.sqrt(H)),
    }


if __name__ == "__main__":
    num_labels = 5
    enc_repr_dim = 32
    hidden_size = 32
    labels = [[1, 0, 2, 3, 1, 4, 0, 2],   # len 8
              [2, 2, 1, 0, 3, 4]]         # len 6
    B = len(labels)
    max_len = max(len(l) for l in labels)

    key = jax.random.PRNGKey(0)
    k_enc, k_par = jax.random.split(key)
    enc_repr = jax.random.normal(k_enc, (B, max_len + 2, enc_repr_dim), jnp.float32)
    params = init_params(k_par, num_labels, enc_repr_dim, hidden_size)

    logits, flat_labels, valid = decoder_forward_pallas(
        enc_repr, labels, params, num_labels, hidden_size)
    jax.block_until_ready(logits)

    # correctness check against the pure-JAX reference of the PyTorch forward
    ref_logits, ref_labels, ref_valid = decoder_forward_ref(
        enc_repr, labels, params, num_labels, hidden_size)
    np.testing.assert_allclose(np.asarray(logits), np.asarray(ref_logits),
                               rtol=1e-4, atol=1e-4)
    np.testing.assert_array_equal(np.asarray(flat_labels), np.asarray(ref_labels))
    np.testing.assert_array_equal(np.asarray(valid), np.asarray(ref_valid))

    print("KERNEL_OK")
</pallas_src>

<mosaic_0001>
module attributes {stable_mosaic.version = 11 : i64} {
  func.func @_lstm_recurrence_kernel(%arg0: i32, %arg1: memref<8x8x128xf32, #tpu.memory_space<vmem>>, %arg2: memref<8x32xf32, #tpu.memory_space<vmem>>, %arg3: memref<32x128xf32, #tpu.memory_space<vmem>>, %arg4: memref<8x8x32xf32, #tpu.memory_space<vmem>>) attributes {dimension_semantics = [#tpu.dimension_semantics<parallel>], iteration_bounds = array<i64: 1>, scalar_prefetch = 0 : i64, scratch_operands = 0 : i64, tpu.core_type = #tpu.core_type<tc>, window_params = [{transform_indices = @transform_0, window_bounds = array<i64: 8, 8, 128>}, {transform_indices = @transform_1, window_bounds = array<i64: 8, 32>}, {pipeline_mode = #tpu.pipeline_mode<synchronous>, transform_indices = @transform_2, window_bounds = array<i64: 32, 128>}, {transform_indices = @transform_3, window_bounds = array<i64: 8, 8, 32>}]} {
    %c0 = arith.constant 0 : index
    %c0_0 = arith.constant 0 : index
    %0 = vector.load %arg3[%c0, %c0_0] : memref<32x128xf32, #tpu.memory_space<vmem>>, vector<32x128xf32>
    %c0_1 = arith.constant 0 : index
    %c0_2 = arith.constant 0 : index
    %1 = vector.load %arg2[%c0_1, %c0_2] : memref<8x32xf32, #tpu.memory_space<vmem>>, vector<8x32xf32>
    %cst = arith.constant 0.000000e+00 : f32
    %2 = vector.broadcast %cst : f32 to vector<8x32xf32>
    %c0_i32 = arith.constant 0 : i32
    %cst_3 = arith.constant dense<0.000000e+00> : vector<8x128xf32>
    %3 = tpu.matmul %1, %0, %cst_3 {dimension_numbers = #tpu.dot_dimension_numbers<[1], [0], [0], [1], [0, 0, 1, 1], [], []>} : vector<8x32xf32>, vector<32x128xf32>, vector<8x128xf32> -> vector<8x128xf32>
    %4 = arith.index_cast %c0_i32 : i32 to index
    %c0_4 = arith.constant 0 : index
    %c0_5 = arith.constant 0 : index
    %5 = vector.load %arg1[%4, %c0_4, %c0_5] : memref<8x8x128xf32, #tpu.memory_space<vmem>>, vector<1x8x128xf32>
    %6 = vector.shape_cast %5 : vector<1x8x128xf32> to vector<8x128xf32>
    %7 = arith.addf %3, %6 : vector<8x128xf32>
    %8 = math.tanh %7 : vector<8x128xf32>
    %9 = vector.extract_strided_slice %8 {offsets = [0, 0], sizes = [8, 32], strides = [1, 1]} : vector<8x128xf32> to vector<8x32xf32>
    %cst_6 = arith.constant 5.000000e-01 : f32
    %10 = vector.broadcast %cst_6 : f32 to vector<8x32xf32>
    %11 = arith.mulf %10, %9 : vector<8x32xf32>
    %cst_7 = arith.constant 5.000000e-01 : f32
    %12 = vector.broadcast %cst_7 : f32 to vector<8x32xf32>
    %13 = arith.addf %11, %12 : vector<8x32xf32>
    %14 = vector.extract_strided_slice %8 {offsets = [0, 32], sizes = [8, 32], strides = [1, 1]} : vector<8x128xf32> to vector<8x32xf32>
    %cst_8 = arith.constant 5.000000e-01 : f32
    %15 = vector.broadcast %cst_8 : f32 to vector<8x32xf32>
    %16 = arith.mulf %15, %14 : vector<8x32xf32>
    %cst_9 = arith.constant 5.000000e-01 : f32
    %17 = vector.broadcast %cst_9 : f32 to vector<8x32xf32>
    %18 = arith.addf %16, %17 : vector<8x32xf32>
    %19 = vector.extract_strided_slice %8 {offsets = [0, 64], sizes = [8, 32], strides = [1, 1]} : vector<8x128xf32> to vector<8x32xf32>
    %20 = vector.extract_strided_slice %8 {offsets = [0, 96], sizes = [8, 32], strides = [1, 1]} : vector<8x128xf32> to vector<8x32xf32>
    %cst_10 = arith.constant 5.000000e-01 : f32
    %21 = vector.broadcast %cst_10 : f32 to vector<8x32xf32>
    %22 = arith.mulf %21, %20 : vector<8x32xf32>
    %cst_11 = arith.constant 5.000000e-01 : f32
    %23 = vector.broadcast %cst_11 : f32 to vector<8x32xf32>
    %24 = arith.addf %22, %23 : vector<8x32xf32>
    %25 = arith.mulf %18, %2 : vector<8x32xf32>
    %26 = arith.mulf %13, %19 : vector<8x32xf32>
    %27 = arith.addf %25, %26 : vector<8x32xf32>
    %28 = math.tanh %27 : vector<8x32xf32>
    %29 = arith.mulf %24, %28 : vector<8x32xf32>
    %30 = arith.index_cast %c0_i32 : i32 to index
    %c0_12 = arith.constant 0 : index
    %c0_13 = arith.constant 0 : index
    %31 = vector.load %arg4[%30, %c0_12, %c0_13] : memref<8x8x32xf32, #tpu.memory_space<vmem>>, vector<1x8x32xf32>
    %32 = vector.shape_cast %31 : vector<1x8x32xf32> to vector<8x32xf32>
    %33 = vector.shape_cast %29 : vector<8x32xf32> to vector<1x8x32xf32>
    tpu.vector_store %arg4[%30, %c0_12, %c0_13], %33 {strides = array<i32>} : memref<8x8x32xf32, #tpu.memory_space<vmem>>, vector<1x8x32xf32>,
    %c1_i32 = arith.constant 1 : i32
    %cst_14 = arith.constant dense<0.000000e+00> : vector<8x128xf32>
    %34 = tpu.matmul %29, %0, %cst_14 {dimension_numbers = #tpu.dot_dimension_numbers<[1], [0], [0], [1], [0, 0, 1, 1], [], []>} : vector<8x32xf32>, vector<32x128xf32>, vector<8x128xf32> -> vector<8x128xf32>
    %35 = arith.index_cast %c1_i32 : i32 to index
    %c0_15 = arith.constant 0 : index
    %c0_16 = arith.constant 0 : index
    %36 = vector.load %arg1[%35, %c0_15, %c0_16] : memref<8x8x128xf32, #tpu.memory_space<vmem>>, vector<1x8x128xf32>
    %37 = vector.shape_cast %36 : vector<1x8x128xf32> to vector<8x128xf32>
    %38 = arith.addf %34, %37 : vector<8x128xf32>
    %39 = math.tanh %38 : vector<8x128xf32>
    %40 = vector.extract_strided_slice %39 {offsets = [0, 0], sizes = [8, 32], strides = [1, 1]} : vector<8x128xf32> to vector<8x32xf32>
    %cst_17 = arith.constant 5.000000e-01 : f32
    %41 = vector.broadcast %cst_17 : f32 to vector<8x32xf32>
    %42 = arith.mulf %41, %40 : vector<8x32xf32>
    %cst_18 = arith.constant 5.000000e-01 : f32
    %43 = vector.broadcast %cst_18 : f32 to vector<8x32xf32>
    %44 = arith.addf %42, %43 : vector<8x32xf32>
    %45 = vector.extract_strided_slice %39 {offsets = [0, 32], sizes = [8, 32], strides = [1, 1]} : vector<8x128xf32> to vector<8x32xf32>
    %cst_19 = arith.constant 5.000000e-01 : f32
    %46 = vector.broadcast %cst_19 : f32 to vector<8x32xf32>
    %47 = arith.mulf %46, %45 : vector<8x32xf32>
    %cst_20 = arith.constant 5.000000e-01 : f32
    %48 = vector.broadcast %cst_20 : f32 to vector<8x32xf32>
    %49 = arith.addf %47, %48 : vector<8x32xf32>
    %50 = vector.extract_strided_slice %39 {offsets = [0, 64], sizes = [8, 32], strides = [1, 1]} : vector<8x128xf32> to vector<8x32xf32>
    %51 = vector.extract_strided_slice %39 {offsets = [0, 96], sizes = [8, 32], strides = [1, 1]} : vector<8x128xf32> to vector<8x32xf32>
    %cst_21 = arith.constant 5.000000e-01 : f32
    %52 = vector.broadcast %cst_21 : f32 to vector<8x32xf32>
    %53 = arith.mulf %52, %51 : vector<8x32xf32>
    %cst_22 = arith.constant 5.000000e-01 : f32
    %54 = vector.broadcast %cst_22 : f32 to vector<8x32xf32>
    %55 = arith.addf %53, %54 : vector<8x32xf32>
    %56 = arith.mulf %49, %27 : vector<8x32xf32>
    %57 = arith.mulf %44, %50 : vector<8x32xf32>
    %58 = arith.addf %56, %57 : vector<8x32xf32>
    %59 = math.tanh %58 : vector<8x32xf32>
    %60 = arith.mulf %55, %59 : vector<8x32xf32>
    %61 = arith.index_cast %c1_i32 : i32 to index
    %c0_23 = arith.constant 0 : index
    %c0_24 = arith.constant 0 : index
    %62 = vector.load %arg4[%61, %c0_23, %c0_24] : memref<8x8x32xf32, #tpu.memory_space<vmem>>, vector<1x8x32xf32>
    %63 = vector.shape_cast %62 : vector<1x8x32xf32> to vector<8x32xf32>
    %64 = vector.shape_cast %60 : vector<8x32xf32> to vector<1x8x32xf32>
    tpu.vector_store %arg4[%61, %c0_23, %c0_24], %64 {strides = array<i32>} : memref<8x8x32xf32, #tpu.memory_space<vmem>>, vector<1x8x32xf32>,
    %c2_i32 = arith.constant 2 : i32
    %cst_25 = arith.constant dense<0.000000e+00> : vector<8x128xf32>
    %65 = tpu.matmul %60, %0, %cst_25 {dimension_numbers = #tpu.dot_dimension_numbers<[1], [0], [0], [1], [0, 0, 1, 1], [], []>} : vector<8x32xf32>, vector<32x128xf32>, vector<8x128xf32> -> vector<8x128xf32>
    %66 = arith.index_cast %c2_i32 : i32 to index
    %c0_26 = arith.constant 0 : index
    %c0_27 = arith.constant 0 : index
    %67 = vector.load %arg1[%66, %c0_26, %c0_27] : memref<8x8x128xf32, #tpu.memory_space<vmem>>, vector<1x8x128xf32>
    %68 = vector.shape_cast %67 : vector<1x8x128xf32> to vector<8x128xf32>
    %69 = arith.addf %65, %68 : vector<8x128xf32>
    %70 = math.tanh %69 : vector<8x128xf32>
    %71 = vector.extract_strided_slice %70 {offsets = [0, 0], sizes = [8, 32], strides = [1, 1]} : vector<8x128xf32> to vector<8x32xf32>
    %cst_28 = arith.constant 5.000000e-01 : f32
    %72 = vector.broadcast %cst_28 : f32 to vector<8x32xf32>
    %73 = arith.mulf %72, %71 : vector<8x32xf32>
    %cst_29 = arith.constant 5.000000e-01 : f32
    %74 = vector.broadcast %cst_29 : f32 to vector<8x32xf32>
    %75 = arith.addf %73, %74 : vector<8x32xf32>
    %76 = vector.extract_strided_slice %70 {offsets = [0, 32], sizes = [8, 32], strides = [1, 1]} : vector<8x128xf32> to vector<8x32xf32>
    %cst_30 = arith.constant 5.000000e-01 : f32
    %77 = vector.broadcast %cst_30 : f32 to vector<8x32xf32>
    %78 = arith.mulf %77, %76 : vector<8x32xf32>
    %cst_31 = arith.constant 5.000000e-01 : f32
    %79 = vector.broadcast %cst_31 : f32 to vector<8x32xf32>
    %80 = arith.addf %78, %79 : vector<8x32xf32>
    %81 = vector.extract_strided_slice %70 {offsets = [0, 64], sizes = [8, 32], strides = [1, 1]} : vector<8x128xf32> to vector<8x32xf32>
    %82 = vector.extract_strided_slice %70 {offsets = [0, 96], sizes = [8, 32], strides = [1, 1]} : vector<8x128xf32> to vector<8x32xf32>
    %cst_32 = arith.constant 5.000000e-01 : f32
    %83 = vector.broadcast %cst_32 : f32 to vector<8x32xf32>
    %84 = arith.mulf %83, %82 : vector<8x32xf32>
    %cst_33 = arith.constant 5.000000e-01 : f32
    %85 = vector.broadcast %cst_33 : f32 to vector<8x32xf32>
    %86 = arith.addf %84, %85 : vector<8x32xf32>
    %87 = arith.mulf %80, %58 : vector<8x32xf32>
    %88 = arith.mulf %75, %81 : vector<8x32xf32>
    %89 = arith.addf %87, %88 : vector<8x32xf32>
    %90 = math.tanh %89 : vector<8x32xf32>
    %91 = arith.mulf %86, %90 : vector<8x32xf32>
    %92 = arith.index_cast %c2_i32 : i32 to index
    %c0_34 = arith.constant 0 : index
    %c0_35 = arith.constant 0 : index
    %93 = vector.load %arg4[%92, %c0_34, %c0_35] : memref<8x8x32xf32, #tpu.memory_space<vmem>>, vector<1x8x32xf32>
    %94 = vector.shape_cast %93 : vector<1x8x32xf32> to vector<8x32xf32>
    %95 = vector.shape_cast %91 : vector<8x32xf32> to vector<1x8x32xf32>
    tpu.vector_store %arg4[%92, %c0_34, %c0_35], %95 {strides = array<i32>} : memref<8x8x32xf32, #tpu.memory_space<vmem>>, vector<1x8x32xf32>,
    %c3_i32 = arith.constant 3 : i32
    %cst_36 = arith.constant dense<0.000000e+00> : vector<8x128xf32>
    %96 = tpu.matmul %91, %0, %cst_36 {dimension_numbers = #tpu.dot_dimension_numbers<[1], [0], [0], [1], [0, 0, 1, 1], [], []>} : vector<8x32xf32>, vector<32x128xf32>, vector<8x128xf32> -> vector<8x128xf32>
    %97 = arith.index_cast %c3_i32 : i32 to index
    %c0_37 = arith.constant 0 : index
    %c0_38 = arith.constant 0 : index
    %98 = vector.load %arg1[%97, %c0_37, %c0_38] : memref<8x8x128xf32, #tpu.memory_space<vmem>>, vector<1x8x128xf32>
    %99 = vector.shape_cast %98 : vector<1x8x128xf32> to vector<8x128xf32>
    %100 = arith.addf %96, %99 : vector<8x128xf32>
    %101 = math.tanh %100 : vector<8x128xf32>
    %102 = vector.extract_strided_slice %101 {offsets = [0, 0], sizes = [8, 32], strides = [1, 1]} : vector<8x128xf32> to vector<8x32xf32>
    %cst_39 = arith.constant 5.000000e-01 : f32
    %103 = vector.broadcast %cst_39 : f32 to vector<8x32xf32>
    %104 = arith.mulf %103, %102 : vector<8x32xf32>
    %cst_40 = arith.constant 5.000000e-01 : f32
    %105 = vector.broadcast %cst_40 : f32 to vector<8x32xf32>
    %106 = arith.addf %104, %105 : vector<8x32xf32>
    %107 = vector.extract_strided_slice %101 {offsets = [0, 32], sizes = [8, 32], strides = [1, 1]} : vector<8x128xf32> to vector<8x32xf32>
    %cst_41 = arith.constant 5.000000e-01 : f32
    %108 = vector.broadcast %cst_41 : f32 to vector<8x32xf32>
    %109 = arith.mulf %108, %107 : vector<8x32xf32>
    %cst_42 = arith.constant 5.000000e-01 : f32
    %110 = vector.broadcast %cst_42 : f32 to vector<8x32xf32>
    %111 = arith.addf %109, %110 : vector<8x32xf32>
    %112 = vector.extract_strided_slice %101 {offsets = [0, 64], sizes = [8, 32], strides = [1, 1]} : vector<8x128xf32> to vector<8x32xf32>
    %113 = vector.extract_strided_slice %101 {offsets = [0, 96], sizes = [8, 32], strides = [1, 1]} : vector<8x128xf32> to vector<8x32xf32>
    %cst_43 = arith.constant 5.000000e-01 : f32
    %114 = vector.broadcast %cst_43 : f32 to vector<8x32xf32>
    %115 = arith.mulf %114, %113 : vector<8x32xf32>
    %cst_44 = arith.constant 5.000000e-01 : f32
    %116 = vector.broadcast %cst_44 : f32 to vector<8x32xf32>
    %117 = arith.addf %115, %116 : vector<8x32xf32>
    %118 = arith.mulf %111, %89 : vector<8x32xf32>
    %119 = arith.mulf %106, %112 : vector<8x32xf32>
    %120 = arith.addf %118, %119 : vector<8x32xf32>
    %121 = math.tanh %120 : vector<8x32xf32>
    %122 = arith.mulf %117, %121 : vector<8x32xf32>
    %123 = arith.index_cast %c3_i32 : i32 to index
    %c0_45 = arith.constant 0 : index
    %c0_46 = arith.constant 0 : index
    %124 = vector.load %arg4[%123, %c0_45, %c0_46] : memref<8x8x32xf32, #tpu.memory_space<vmem>>, vector<1x8x32xf32>
    %125 = vector.shape_cast %124 : vector<1x8x32xf32> to vector<8x32xf32>
    %126 = vector.shape_cast %122 : vector<8x32xf32> to vector<1x8x32xf32>
    tpu.vector_store %arg4[%123, %c0_45, %c0_46], %126 {strides = array<i32>} : memref<8x8x32xf32, #tpu.memory_space<vmem>>, vector<1x8x32xf32>,
    %c4_i32 = arith.constant 4 : i32
    %cst_47 = arith.constant dense<0.000000e+00> : vector<8x128xf32>
    %127 = tpu.matmul %122, %0, %cst_47 {dimension_numbers = #tpu.dot_dimension_numbers<[1], [0], [0], [1], [0, 0, 1, 1], [], []>} : vector<8x32xf32>, vector<32x128xf32>, vector<8x128xf32> -> vector<8x128xf32>
    %128 = arith.index_cast %c4_i32 : i32 to index
    %c0_48 = arith.constant 0 : index
    %c0_49 = arith.constant 0 : index
    %129 = vector.load %arg1[%128, %c0_48, %c0_49] : memref<8x8x128xf32, #tpu.memory_space<vmem>>, vector<1x8x128xf32>
    %130 = vector.shape_cast %129 : vector<1x8x128xf32> to vector<8x128xf32>
    %131 = arith.addf %127, %130 : vector<8x128xf32>
    %132 = math.tanh %131 : vector<8x128xf32>
    %133 = vector.extract_strided_slice %132 {offsets = [0, 0], sizes = [8, 32], strides = [1, 1]} : vector<8x128xf32> to vector<8x32xf32>
    %cst_50 = arith.constant 5.000000e-01 : f32
    %134 = vector.broadcast %cst_50 : f32 to vector<8x32xf32>
    %135 = arith.mulf %134, %133 : vector<8x32xf32>
    %cst_51 = arith.constant 5.000000e-01 : f32
    %136 = vector.broadcast %cst_51 : f32 to vector<8x32xf32>
    %137 = arith.addf %135, %136 : vector<8x32xf32>
    %138 = vector.extract_strided_slice %132 {offsets = [0, 32], sizes = [8, 32], strides = [1, 1]} : vector<8x128xf32> to vector<8x32xf32>
    %cst_52 = arith.constant 5.000000e-01 : f32
    %139 = vector.broadcast %cst_52 : f32 to vector<8x32xf32>
    %140 = arith.mulf %139, %138 : vector<8x32xf32>
    %cst_53 = arith.constant 5.000000e-01 : f32
    %141 = vector.broadcast %cst_53 : f32 to vector<8x32xf32>
    %142 = arith.addf %140, %141 : vector<8x32xf32>
    %143 = vector.extract_strided_slice %132 {offsets = [0, 64], sizes = [8, 32], strides = [1, 1]} : vector<8x128xf32> to vector<8x32xf32>
    %144 = vector.extract_strided_slice %132 {offsets = [0, 96], sizes = [8, 32], strides = [1, 1]} : vector<8x128xf32> to vector<8x32xf32>
    %cst_54 = arith.constant 5.000000e-01 : f32
    %145 = vector.broadcast %cst_54 : f32 to vector<8x32xf32>
    %146 = arith.mulf %145, %144 : vector<8x32xf32>
    %cst_55 = arith.constant 5.000000e-01 : f32
    %147 = vector.broadcast %cst_55 : f32 to vector<8x32xf32>
    %148 = arith.addf %146, %147 : vector<8x32xf32>
    %149 = arith.mulf %142, %120 : vector<8x32xf32>
    %150 = arith.mulf %137, %143 : vector<8x32xf32>
    %151 = arith.addf %149, %150 : vector<8x32xf32>
    %152 = math.tanh %151 : vector<8x32xf32>
    %153 = arith.mulf %148, %152 : vector<8x32xf32>
    %154 = arith.index_cast %c4_i32 : i32 to index
    %c0_56 = arith.constant 0 : index
    %c0_57 = arith.constant 0 : index
    %155 = vector.load %arg4[%154, %c0_56, %c0_57] : memref<8x8x32xf32, #tpu.memory_space<vmem>>, vector<1x8x32xf32>
    %156 = vector.shape_cast %155 : vector<1x8x32xf32> to vector<8x32xf32>
    %157 = vector.shape_cast %153 : vector<8x32xf32> to vector<1x8x32xf32>
    tpu.vector_store %arg4[%154, %c0_56, %c0_57], %157 {strides = array<i32>} : memref<8x8x32xf32, #tpu.memory_space<vmem>>, vector<1x8x32xf32>,
    %c5_i32 = arith.constant 5 : i32
    %cst_58 = arith.constant dense<0.000000e+00> : vector<8x128xf32>
    %158 = tpu.matmul %153, %0, %cst_58 {dimension_numbers = #tpu.dot_dimension_numbers<[1], [0], [0], [1], [0, 0, 1, 1], [], []>} : vector<8x32xf32>, vector<32x128xf32>, vector<8x128xf32> -> vector<8x128xf32>
    %159 = arith.index_cast %c5_i32 : i32 to index
    %c0_59 = arith.constant 0 : index
    %c0_60 = arith.constant 0 : index
    %160 = vector.load %arg1[%159, %c0_59, %c0_60] : memref<8x8x128xf32, #tpu.memory_space<vmem>>, vector<1x8x128xf32>
    %161 = vector.shape_cast %160 : vector<1x8x128xf32> to vector<8x128xf32>
    %162 = arith.addf %158, %161 : vector<8x128xf32>
    %163 = math.tanh %162 : vector<8x128xf32>
    %164 = vector.extract_strided_slice %163 {offsets = [0, 0], sizes = [8, 32], strides = [1, 1]} : vector<8x128xf32> to vector<8x32xf32>
    %cst_61 = arith.constant 5.000000e-01 : f32
    %165 = vector.broadcast %cst_61 : f32 to vector<8x32xf32>
    %166 = arith.mulf %165, %164 : vector<8x32xf32>
    %cst_62 = arith.constant 5.000000e-01 : f32
    %167 = vector.broadcast %cst_62 : f32 to vector<8x32xf32>
    %168 = arith.addf %166, %167 : vector<8x32xf32>
    %169 = vector.extract_strided_slice %163 {offsets = [0, 32], sizes = [8, 32], strides = [1, 1]} : vector<8x128xf32> to vector<8x32xf32>
    %cst_63 = arith.constant 5.000000e-01 : f32
    %170 = vector.broadcast %cst_63 : f32 to vector<8x32xf32>
    %171 = arith.mulf %170, %169 : vector<8x32xf32>
    %cst_64 = arith.constant 5.000000e-01 : f32
    %172 = vector.broadcast %cst_64 : f32 to vector<8x32xf32>
    %173 = arith.addf %171, %172 : vector<8x32xf32>
    %174 = vector.extract_strided_slice %163 {offsets = [0, 64], sizes = [8, 32], strides = [1, 1]} : vector<8x128xf32> to vector<8x32xf32>
    %175 = vector.extract_strided_slice %163 {offsets = [0, 96], sizes = [8, 32], strides = [1, 1]} : vector<8x128xf32> to vector<8x32xf32>
    %cst_65 = arith.constant 5.000000e-01 : f32
    %176 = vector.broadcast %cst_65 : f32 to vector<8x32xf32>
    %177 = arith.mulf %176, %175 : vector<8x32xf32>
    %cst_66 = arith.constant 5.000000e-01 : f32
    %178 = vector.broadcast %cst_66 : f32 to vector<8x32xf32>
    %179 = arith.addf %177, %178 : vector<8x32xf32>
    %180 = arith.mulf %173, %151 : vector<8x32xf32>
    %181 = arith.mulf %168, %174 : vector<8x32xf32>
    %182 = arith.addf %180, %181 : vector<8x32xf32>
    %183 = math.tanh %182 : vector<8x32xf32>
    %184 = arith.mulf %179, %183 : vector<8x32xf32>
    %185 = arith.index_cast %c5_i32 : i32 to index
    %c0_67 = arith.constant 0 : index
    %c0_68 = arith.constant 0 : index
    %186 = vector.load %arg4[%185, %c0_67, %c0_68] : memref<8x8x32xf32, #tpu.memory_space<vmem>>, vector<1x8x32xf32>
    %187 = vector.shape_cast %186 : vector<1x8x32xf32> to vector<8x32xf32>
    %188 = vector.shape_cast %184 : vector<8x32xf32> to vector<1x8x32xf32>
    tpu.vector_store %arg4[%185, %c0_67, %c0_68], %188 {strides = array<i32>} : memref<8x8x32xf32, #tpu.memory_space<vmem>>, vector<1x8x32xf32>,
    %c6_i32 = arith.constant 6 : i32
    %cst_69 = arith.constant dense<0.000000e+00> : vector<8x128xf32>
    %189 = tpu.matmul %184, %0, %cst_69 {dimension_numbers = #tpu.dot_dimension_numbers<[1], [0], [0], [1], [0, 0, 1, 1], [], []>} : vector<8x32xf32>, vector<32x128xf32>, vector<8x128xf32> -> vector<8x128xf32>
    %190 = arith.index_cast %c6_i32 : i32 to index
    %c0_70 = arith.constant 0 : index
    %c0_71 = arith.constant 0 : index
    %191 = vector.load %arg1[%190, %c0_70, %c0_71] : memref<8x8x128xf32, #tpu.memory_space<vmem>>, vector<1x8x128xf32>
    %192 = vector.shape_cast %191 : vector<1x8x128xf32> to vector<8x128xf32>
    %193 = arith.addf %189, %192 : vector<8x128xf32>
    %194 = math.tanh %193 : vector<8x128xf32>
    %195 = vector.extract_strided_slice %194 {offsets = [0, 0], sizes = [8, 32], strides = [1, 1]} : vector<8x128xf32> to vector<8x32xf32>
    %cst_72 = arith.constant 5.000000e-01 : f32
    %196 = vector.broadcast %cst_72 : f32 to vector<8x32xf32>
    %197 = arith.mulf %196, %195 : vector<8x32xf32>
    %cst_73 = arith.constant 5.000000e-01 : f32
    %198 = vector.broadcast %cst_73 : f32 to vector<8x32xf32>
    %199 = arith.addf %197, %198 : vector<8x32xf32>
    %200 = vector.extract_strided_slice %194 {offsets = [0, 32], sizes = [8, 32], strides = [1, 1]} : vector<8x128xf32> to vector<8x32xf32>
    %cst_74 = arith.constant 5.000000e-01 : f32
    %201 = vector.broadcast %cst_74 : f32 to vector<8x32xf32>
    %202 = arith.mulf %201, %200 : vector<8x32xf32>
    %cst_75 = arith.constant 5.000000e-01 : f32
    %203 = vector.broadcast %cst_75 : f32 to vector<8x32xf32>
    %204 = arith.addf %202, %203 : vector<8x32xf32>
    %205 = vector.extract_strided_slice %194 {offsets = [0, 64], sizes = [8, 32], strides = [1, 1]} : vector<8x128xf32> to vector<8x32xf32>
    %206 = vector.extract_strided_slice %194 {offsets = [0, 96], sizes = [8, 32], strides = [1, 1]} : vector<8x128xf32> to vector<8x32xf32>
    %cst_76 = arith.constant 5.000000e-01 : f32
    %207 = vector.broadcast %cst_76 : f32 to vector<8x32xf32>
    %208 = arith.mulf %207, %206 : vector<8x32xf32>
    %cst_77 = arith.constant 5.000000e-01 : f32
    %209 = vector.broadcast %cst_77 : f32 to vector<8x32xf32>
    %210 = arith.addf %208, %209 : vector<8x32xf32>
    %211 = arith.mulf %204, %182 : vector<8x32xf32>
    %212 = arith.mulf %199, %205 : vector<8x32xf32>
    %213 = arith.addf %211, %212 : vector<8x32xf32>
    %214 = math.tanh %213 : vector<8x32xf32>
    %215 = arith.mulf %210, %214 : vector<8x32xf32>
    %216 = arith.index_cast %c6_i32 : i32 to index
    %c0_78 = arith.constant 0 : index
    %c0_79 = arith.constant 0 : index
    %217 = vector.load %arg4[%216, %c0_78, %c0_79] : memref<8x8x32xf32, #tpu.memory_space<vmem>>, vector<1x8x32xf32>
    %218 = vector.shape_cast %217 : vector<1x8x32xf32> to vector<8x32xf32>
    %219 = vector.shape_cast %215 : vector<8x32xf32> to vector<1x8x32xf32>
    tpu.vector_store %arg4[%216, %c0_78, %c0_79], %219 {strides = array<i32>} : memref<8x8x32xf32, #tpu.memory_space<vmem>>, vector<1x8x32xf32>,
    %c7_i32 = arith.constant 7 : i32
    %cst_80 = arith.constant dense<0.000000e+00> : vector<8x128xf32>
    %220 = tpu.matmul %215, %0, %cst_80 {dimension_numbers = #tpu.dot_dimension_numbers<[1], [0], [0], [1], [0, 0, 1, 1], [], []>} : vector<8x32xf32>, vector<32x128xf32>, vector<8x128xf32> -> vector<8x128xf32>
    %221 = arith.index_cast %c7_i32 : i32 to index
    %c0_81 = arith.constant 0 : index
    %c0_82 = arith.constant 0 : index
    %222 = vector.load %arg1[%221, %c0_81, %c0_82] : memref<8x8x128xf32, #tpu.memory_space<vmem>>, vector<1x8x128xf32>
    %223 = vector.shape_cast %222 : vector<1x8x128xf32> to vector<8x128xf32>
    %224 = arith.addf %220, %223 : vector<8x128xf32>
    %225 = math.tanh %224 : vector<8x128xf32>
    %226 = vector.extract_strided_slice %225 {offsets = [0, 0], sizes = [8, 32], strides = [1, 1]} : vector<8x128xf32> to vector<8x32xf32>
    %cst_83 = arith.constant 5.000000e-01 : f32
    %227 = vector.broadcast %cst_83 : f32 to vector<8x32xf32>
    %228 = arith.mulf %227, %226 : vector<8x32xf32>
    %cst_84 = arith.constant 5.000000e-01 : f32
    %229 = vector.broadcast %cst_84 : f32 to vector<8x32xf32>
    %230 = arith.addf %228, %229 : vector<8x32xf32>
    %231 = vector.extract_strided_slice %225 {offsets = [0, 32], sizes = [8, 32], strides = [1, 1]} : vector<8x128xf32> to vector<8x32xf32>
    %cst_85 = arith.constant 5.000000e-01 : f32
    %232 = vector.broadcast %cst_85 : f32 to vector<8x32xf32>
    %233 = arith.mulf %232, %231 : vector<8x32xf32>
    %cst_86 = arith.constant 5.000000e-01 : f32
    %234 = vector.broadcast %cst_86 : f32 to vector<8x32xf32>
    %235 = arith.addf %233, %234 : vector<8x32xf32>
    %236 = vector.extract_strided_slice %225 {offsets = [0, 64], sizes = [8, 32], strides = [1, 1]} : vector<8x128xf32> to vector<8x32xf32>
    %237 = vector.extract_strided_slice %225 {offsets = [0, 96], sizes = [8, 32], strides = [1, 1]} : vector<8x128xf32> to vector<8x32xf32>
    %cst_87 = arith.constant 5.000000e-01 : f32
    %238 = vector.broadcast %cst_87 : f32 to vector<8x32xf32>
    %239 = arith.mulf %238, %237 : vector<8x32xf32>
    %cst_88 = arith.constant 5.000000e-01 : f32
    %240 = vector.broadcast %cst_88 : f32 to vector<8x32xf32>
    %241 = arith.addf %239, %240 : vector<8x32xf32>
    %242 = arith.mulf %235, %213 : vector<8x32xf32>
    %243 = arith.mulf %230, %236 : vector<8x32xf32>
    %244 = arith.addf %242, %243 : vector<8x32xf32>
    %245 = math.tanh %244 : vector<8x32xf32>
    %246 = arith.mulf %241, %245 : vector<8x32xf32>
    %247 = arith.index_cast %c7_i32 : i32 to index
    %c0_89 = arith.constant 0 : index
    %c0_90 = arith.constant 0 : index
    %248 = vector.load %arg4[%247, %c0_89, %c0_90] : memref<8x8x32xf32, #tpu.memory_space<vmem>>, vector<1x8x32xf32>
    %249 = vector.shape_cast %248 : vector<1x8x32xf32> to vector<8x32xf32>
    %250 = vector.shape_cast %246 : vector<8x32xf32> to vector<1x8x32xf32>
    tpu.vector_store %arg4[%247, %c0_89, %c0_90], %250 {strides = array<i32>} : memref<8x8x32xf32, #tpu.memory_space<vmem>>, vector<1x8x32xf32>,
    %c8_i32 = arith.constant 8 : i32
    return
  }
  func.func @transform_0(%arg0: i32) -> (i32, i32, i32) {
    %c0_i32 = arith.constant 0 : i32
    %c0_i32_0 = arith.constant 0 : i32
    %c0_i32_1 = arith.constant 0 : i32
    return %c0_i32, %arg0, %c0_i32_0 : i32, i32, i32
  }
  func.func @transform_1(%arg0: i32) -> (i32, i32) {
    %c0_i32 = arith.constant 0 : i32
    %c0_i32_0 = arith.constant 0 : i32
    return %arg0, %c0_i32 : i32, i32
  }
  func.func @transform_2(%arg0: i32) -> (i32, i32) {
    %c0_i32 = arith.constant 0 : i32
    %c0_i32_0 = arith.constant 0 : i32
    %c0_i32_1 = arith.constant 0 : i32
    return %c0_i32, %c0_i32_0 : i32, i32
  }
  func.func @transform_3(%arg0: i32) -> (i32, i32, i32) {
    %c0_i32 = arith.constant 0 : i32
    %c0_i32_0 = arith.constant 0 : i32
    %c0_i32_1 = arith.constant 0 : i32
    return %c0_i32, %arg0, %c0_i32_0 : i32, i32, i32
  }
}

</mosaic_0001>

<llo_original>
// kernel: tpu_custom_call.1
$region0: #{tpu_custom_call.1}
  #allocation0 [shape = 'u32[]', space=smem, size = 0x4, offset = 0x4, fixed_abs, tag = 'smem constant byte address 0x4 - core index']
  #allocation1 [shape = 'u32[144,128]{1,0:T(1,128)}', space=vmem, size = 0x12000, scoped, tag = 'internal scratch']
  %s0 = inlined_call_operand.hbm [shape: f32[8,8,128], index: 0, kind: input, shape index: {}]
  %s1 = inlined_call_operand.hbm [shape: f32[8,32], index: 1, kind: input, shape index: {}]
  %s2 = inlined_call_operand.hbm [shape: f32[32,128], index: 2, kind: input, shape index: {}]
  %s3 = inlined_call_operand.hbm [shape: f32[8,8,32], index: 3, kind: output, shape index: {}]
  %s4 = sld [smem:[#allocation0]]
  $region34: #{tpu_custom_call.1} parent=0
    _
  %s6 = ssub.s32 1, %s4
  %s7 = scalar_select 0, %s6, %s4
  $region1: #{tpu_custom_call.1} parent=0
    #allocation2 [shape = 'u8[32768]{0}', space=vmem, size = 0x8000, scoped, tag = 'input window, operand 0, single buffered']
    #allocation3 [shape = 's32[1]{0}', space=sflag, size = 0x4, scoped, tag = 'scoped memory for tpu_custom_call.1']
    #allocation4 [shape = 's32[1]{0}', space=sflag, size = 0x4, scoped, tag = 'scoped memory for tpu_custom_call.1']
    #allocation5 [shape = 'u8[4096]{0}', space=vmem, size = 0x1000, scoped, tag = 'input window, operand 1, single buffered']
    #allocation6 [shape = 's32[1]{0}', space=sflag, size = 0x4, scoped, tag = 'scoped memory for tpu_custom_call.1']
    #allocation7 [shape = 'u8[16384]{0}', space=vmem, size = 0x4000, scoped, tag = 'input window, operand 2, single buffered']
    #allocation8 [shape = 'u8[32768]{0}', space=vmem, size = 0x8000, scoped, tag = 'output window, operand 0, single buffered']
    %8 = vsyncpa [#allocation3], 0
    %9 = vsyncpa [#allocation6], 0
    %10 = vsyncpa [#allocation4], 0
    // Predicated region
    $region2: #{tpu_custom_call.1} parent=1 // pred_check
      _
    $region3: #{tpu_custom_call.1} parent=1 // pred_check_branch
      %12 = sbr.rel (0) target = $region5
    $region4: #{tpu_custom_call.1} parent=1 // pred_region
      %s14 = ssub.s32 1024, 1024
      %15 = vsyncadd [#allocation3], %s14
      %s16 = sshll.u32 [#allocation2], 4
      %s17 = int_to_ptr.vmem [resolvable:$true] %s16
      %22 = dma.hbm_to_vmem [thread:$0]  %s0, 1024, %s17, [#allocation3], 128, 128, 8
    $region5: #{tpu_custom_call.1} parent=1 // pred_fallthru
      _
    // Predicated region
    $region6: #{tpu_custom_call.1} parent=1 // pred_check
      _
    $region7: #{tpu_custom_call.1} parent=1 // pred_check_branch
      %24 = sbr.rel (0) target = $region9
    $region8: #{tpu_custom_call.1} parent=1 // pred_region
      %s26 = ssub.s32 128, 128
      %27 = vsyncadd [#allocation6], %s26
      %s29 = sshll.u32 [#allocation5], 4
      %s30 = int_to_ptr.vmem [resolvable:$true] %s29
      %32 = dma.hbm_to_vmem [thread:$0]  %s1, 128, %s30, [#allocation6]
    $region9: #{tpu_custom_call.1} parent=1 // pred_fallthru
      _
    // Predicated region
    $region10: #{tpu_custom_call.1} parent=1 // pred_check
      _
    $region11: #{tpu_custom_call.1} parent=1 // pred_check_branch
      %34 = sbr.rel (0) target = $region13
    $region12: #{tpu_custom_call.1} parent=1 // pred_region
      %s36 = ssub.s32 512, 512
      %37 = vsyncadd [#allocation6], %s36
      %s38 = sshll.u32 [#allocation7], 4
      %s39 = int_to_ptr.vmem [resolvable:$true] %s38
      %44 = dma.hbm_to_vmem [thread:$0]  %s2, 512, %s39, [#allocation6], 128, 128, 8
    $region13: #{tpu_custom_call.1} parent=1 // pred_fallthru
      _
    // Predicated region
    $region14: #{tpu_custom_call.1} parent=1 // pred_check
      _
    $region15: #{tpu_custom_call.1} parent=1 // pred_check_branch
      %46 = sbr.rel (0) target = $region17
    $region16: #{tpu_custom_call.1} parent=1 // pred_region
      %47 = dma.done [#allocation3], 1024
    $region17: #{tpu_custom_call.1} parent=1 // pred_fallthru
      _
    // Predicated region
    $region18: #{tpu_custom_call.1} parent=1 // pred_check
      _
    $region19: #{tpu_custom_call.1} parent=1 // pred_check_branch
      %49 = sbr.rel (0) target = $region21
    $region20: #{tpu_custom_call.1} parent=1 // pred_region
      %50 = dma.done [#allocation6], 128
    $region21: #{tpu_custom_call.1} parent=1 // pred_fallthru
      _
    // Predicated region
    $region22: #{tpu_custom_call.1} parent=1 // pred_check
      _
    $region23: #{tpu_custom_call.1} parent=1 // pred_check_branch
      %52 = sbr.rel (0) target = $region25
    $region24: #{tpu_custom_call.1} parent=1 // pred_region
      %53 = dma.done [#allocation6], 512
    $region25: #{tpu_custom_call.1} parent=1 // pred_fallthru
      _
    %v54 = vld [vmem:[#allocation7] sm:$0xff]
    %v55 = vld [vmem:[#allocation7 + $0x8] sm:$0xff]
    %v56 = vld [vmem:[#allocation7 + $0x10] sm:$0xff]
    %v57 = vld [vmem:[#allocation7 + $0x18] sm:$0xff]
    %v58 = vld [vmem:[#allocation5] sm:$0xff]
    %v59 = vld [vmem:[#allocation2] sm:$0xff]
    %vm60 = vcmask 261120
    %v62 = vsel %vm60, %v58, 0
    %64 = vmatprep.subr.mxu0 0.0
    %65 = vmatpush1.msra.mxu0 0.0
    %66 = vmatprep.subr.mxu0 0.0
    %67 = vmatpush1.msra.mxu0 0.0
    %68 = vmatprep.subr.mxu0 0.0
    %69 = vmatpush1.msra.mxu0 0.0
    %70 = vmatprep.subr.mxu0 0.0
    %71 = vmatpush1.msra.mxu0 0.0
    %72 = vmatprep.subr.mxu0 0.0
    %73 = vmatpush1.msra.mxu0 0.0
    %74 = vmatprep.subr.mxu0 0.0
    %75 = vmatpush1.msra.mxu0 0.0
    %76 = vmatprep.subr.mxu0 0.0
    %77 = vmatpush1.msra.mxu0 0.0
    %78 = vmatprep.subr.mxu0 0.0
    %79 = vmatpush1.msra.mxu0 0.0
    %80 = vmatprep.subr.mxu0 0.0
    %81 = vmatpush1.msra.mxu0 0.0
    %82 = vmatprep.subr.mxu0 0.0
    %83 = vmatpush1.msra.mxu0 0.0
    %84 = vmatprep.subr.mxu0 0.0
    %85 = vmatpush1.msra.mxu0 0.0
    %86 = vmatprep.subr.mxu0 0.0
    %87 = vmatpush1.msra.mxu0 0.0
    %88 = vmatprep.subr.mxu0 0.0
    %89 = vmatpush1.msra.mxu0 %v57
    %90 = vmatprep.subr.mxu0 0.0
    %91 = vmatpush1.msra.mxu0 %v56
    %92 = vmatprep.subr.mxu0 0.0
    %93 = vmatpush1.msra.mxu0 %v55
    %94 = vmatprep.subr.mxu0 0.0
    %95 = vmatpush1.msra.mxu0 %v54
    %96 = vmatprep.subr.mxu0 0.0
    %97 = vmatpush2.msra.mxu0 0.0
    %98 = vmatprep.subr.mxu0 0.0
    %99 = vmatpush2.msra.mxu0 0.0
    %100 = vmatprep.subr.mxu0 0.0
    %101 = vmatpush2.msra.mxu0 0.0
    %102 = vmatprep.subr.mxu0 0.0
    %103 = vmatpush2.msra.mxu0 0.0
    %104 = vmatprep.subr.mxu0 0.0
    %105 = vmatpush2.msra.mxu0 0.0
    %106 = vmatprep.subr.mxu0 0.0
    %107 = vmatpush2.msra.mxu0 0.0
    %108 = vmatprep.subr.mxu0 0.0
    %109 = vmatpush2.msra.mxu0 0.0
    %110 = vmatprep.subr.mxu0 0.0
    %111 = vmatpush2.msra.mxu0 0.0
    %112 = vmatprep.subr.mxu0 0.0
    %113 = vmatpush2.msra.mxu0 0.0
    %114 = vmatprep.subr.mxu0 0.0
    %115 = vmatpush2.msra.mxu0 0.0
    %116 = vmatprep.subr.mxu0 0.0
    %117 = vmatpush2.msra.mxu0 0.0
    %118 = vmatprep.subr.mxu0 0.0
    %119 = vmatpush2.msra.mxu0 0.0
    %120 = vmatprep.subr.mxu0 0.0
    %121 = vmatpush2.msra.mxu0 0.0
    %122 = vmatprep.subr.mxu0 0.0
    %123 = vmatpush2.msra.mxu0 0.0
    %124 = vmatprep.subr.mxu0 0.0
    %125 = vmatpush2.msra.mxu0 0.0
    %126 = vmatprep.subr.mxu0 0.0
    %127 = vmatpush2.msra.mxu0 0.0
    %128 = vmatprep.mubr.f32.mxu0 0.0
    %129 = vmatmul.mubr.f32.gmra.mxu0 %v62
    %v130 = vpop.f32.mrf.mxu0
    %v131 = vadd.f32 %v59, %v130
    %v132 = vpop.f32.mrf.mxu0
    %133 = vdwg.mxu0
    %v134 = vtanh.pop %v131
    %v135 = vmul.f32 %v134, 0.5
    %v136 = vadd.f32 %v135, 0.5
    %v137 = vmul.f32 %v136, 0.0
    %139 = vrot.lane.b32.xlu0 %v134, 64
    %v140 = vpop.permute.xlu0 %139
    %v142 = vmul.f32 %v136, %v140
    %144 = vrot.lane.b32.xlu0 %v142, 32
    %v145 = vpop.permute.xlu0 %144
    %v147 = vadd.f32 %v137, %v145
    %v148 = vtanh.pop %v147
    %150 = vrot.lane.b32.xlu0 %v148, 64
    %v151 = vpop.permute.xlu0 %150
    %v153 = vmul.f32 %v136, %v151
    %155 = vrot.lane.b32.xlu0 %v153, 32
    %v156 = vpop.permute.xlu0 %155
    %158 = vst.msk [vmem:[#allocation8] sm:$0xff] %vm60, %v156
    %s159 = scalar_lea.vmem [#allocation2], 8
    %v160 = vld [vmem:[%s159] sm:$0xff]
    %v161 = vsel %vm60, %v156, 0
    %163 = vmatprep.subr.mxu0 0.0
    %164 = vmatpush1.msra.mxu0 0.0
    %165 = vmatprep.subr.mxu0 0.0
    %166 = vmatpush1.msra.mxu0 0.0
    %167 = vmatprep.subr.mxu0 0.0
    %168 = vmatpush1.msra.mxu0 0.0
    %169 = vmatprep.subr.mxu0 0.0
    %170 = vmatpush1.msra.mxu0 0.0
    %171 = vmatprep.subr.mxu0 0.0
    %172 = vmatpush1.msra.mxu0 0.0
    %173 = vmatprep.subr.mxu0 0.0
    %174 = vmatpush1.msra.mxu0 0.0
    %175 = vmatprep.subr.mxu0 0.0
    %176 = vmatpush1.msra.mxu0 0.0
    %177 = vmatprep.subr.mxu0 0.0
    %178 = vmatpush1.msra.mxu0 0.0
    %179 = vmatprep.subr.mxu0 0.0
    %180 = vmatpush1.msra.mxu0 0.0
    %181 = vmatprep.subr.mxu0 0.0
    %182 = vmatpush1.msra.mxu0 0.0
    %183 = vmatprep.subr.mxu0 0.0
    %184 = vmatpush1.msra.mxu0 0.0
    %185 = vmatprep.subr.mxu0 0.0
    %186 = vmatpush1.msra.mxu0 0.0
    %187 = vmatprep.subr.mxu0 0.0
    %188 = vmatpush1.msra.mxu0 %v57
    %189 = vmatprep.subr.mxu0 0.0
    %190 = vmatpush1.msra.mxu0 %v56
    %191 = vmatprep.subr.mxu0 0.0
    %192 = vmatpush1.msra.mxu0 %v55
    %193 = vmatprep.subr.mxu0 0.0
    %194 = vmatpush1.msra.mxu0 %v54
    %195 = vmatprep.subr.mxu0 0.0
    %196 = vmatpush2.msra.mxu0 0.0
    %197 = vmatprep.subr.mxu0 0.0
    %198 = vmatpush2.msra.mxu0 0.0
    %199 = vmatprep.subr.mxu0 0.0
    %200 = vmatpush2.msra.mxu0 0.0
    %201 = vmatprep.subr.mxu0 0.0
    %202 = vmatpush2.msra.mxu0 0.0
    %203 = vmatprep.subr.mxu0 0.0
    %204 = vmatpush2.msra.mxu0 0.0
    %205 = vmatprep.subr.mxu0 0.0
    %206 = vmatpush2.msra.mxu0 0.0
    %207 = vmatprep.subr.mxu0 0.0
    %208 = vmatpush2.msra.mxu0 0.0
    %209 = vmatprep.subr.mxu0 0.0
    %210 = vmatpush2.msra.mxu0 0.0
    %211 = vmatprep.subr.mxu0 0.0
    %212 = vmatpush2.msra.mxu0 0.0
    %213 = vmatprep.subr.mxu0 0.0
    %214 = vmatpush2.msra.mxu0 0.0
    %215 = vmatprep.subr.mxu0 0.0
    %216 = vmatpush2.msra.mxu0 0.0
    %217 = vmatprep.subr.mxu0 0.0
    %218 = vmatpush2.msra.mxu0 0.0
    %219 = vmatprep.subr.mxu0 0.0
    %220 = vmatpush2.msra.mxu0 0.0
    %221 = vmatprep.subr.mxu0 0.0
    %222 = vmatpush2.msra.mxu0 0.0
    %223 = vmatprep.subr.mxu0 0.0
    %224 = vmatpush2.msra.mxu0 0.0
    %225 = vmatprep.subr.mxu0 0.0
    %226 = vmatpush2.msra.mxu0 0.0
    %227 = vmatprep.mubr.f32.mxu0 0.0
    %228 = vmatmul.mubr.f32.gmra.mxu0 %v161
    %v229 = vpop.f32.mrf.mxu0
    %v230 = vadd.f32 %v160, %v229
    %v231 = vpop.f32.mrf.mxu0
    %232 = vdwg.mxu0
    %v233 = vtanh.pop %v230
    %v234 = vmul.f32 %v233, 0.5
    %v235 = vadd.f32 %v234, 0.5
    %v236 = vmul.f32 %v235, %v147
    %238 = vrot.lane.b32.xlu0 %v233, 64
    %v239 = vpop.permute.xlu0 %238
    %v241 = vmul.f32 %v235, %v239
    %243 = vrot.lane.b32.xlu0 %v241, 32
    %v244 = vpop.permute.xlu0 %243
    %v246 = vadd.f32 %v236, %v244
    %v247 = vtanh.pop %v246
    %249 = vrot.lane.b32.xlu0 %v247, 64
    %v250 = vpop.permute.xlu0 %249
    %v252 = vmul.f32 %v235, %v250
    %254 = vrot.lane.b32.xlu0 %v252, 32
    %v255 = vpop.permute.xlu0 %254
    %s257 = scalar_lea.vmem [#allocation8], 8
    %258 = vst.msk [vmem:[%s257] sm:$0xff] %vm60, %v255
    %s259 = scalar_lea.vmem [#allocation2], 16
    %v260 = vld [vmem:[%s259] sm:$0xff]
    %v261 = vsel %vm60, %v255, 0
    %263 = vmatprep.subr.mxu0 0.0
    %264 = vmatpush1.msra.mxu0 0.0
    %265 = vmatprep.subr.mxu0 0.0
    %266 = vmatpush1.msra.mxu0 0.0
    %267 = vmatprep.subr.mxu0 0.0
    %268 = vmatpush1.msra.mxu0 0.0
    %269 = vmatprep.subr.mxu0 0.0
    %270 = vmatpush1.msra.mxu0 0.0
    %271 = vmatprep.subr.mxu0 0.0
    %272 = vmatpush1.msra.mxu0 0.0
    %273 = vmatprep.subr.mxu0 0.0
    %274 = vmatpush1.msra.mxu0 0.0
    %275 = vmatprep.subr.mxu0 0.0
    %276 = vmatpush1.msra.mxu0 0.0
    %277 = vmatprep.subr.mxu0 0.0
    %278 = vmatpush1.msra.mxu0 0.0
    %279 = vmatprep.subr.mxu0 0.0
    %280 = vmatpush1.msra.mxu0 0.0
    %281 = vmatprep.subr.mxu0 0.0
    %282 = vmatpush1.msra.mxu0 0.0
    %283 = vmatprep.subr.mxu0 0.0
    %284 = vmatpush1.msra.mxu0 0.0
    %285 = vmatprep.subr.mxu0 0.0
    %286 = vmatpush1.msra.mxu0 0.0
    %287 = vmatprep.subr.mxu0 0.0
    %288 = vmatpush1.msra.mxu0 %v57
    %289 = vmatprep.subr.mxu0 0.0
    %290 = vmatpush1.msra.mxu0 %v56
    %291 = vmatprep.subr.mxu0 0.0
    %292 = vmatpush1.msra.mxu0 %v55
    %293 = vmatprep.subr.mxu0 0.0
    %294 = vmatpush1.msra.mxu0 %v54
    %295 = vmatprep.subr.mxu0 0.0
    %296 = vmatpush2.msra.mxu0 0.0
    %297 = vmatprep.subr.mxu0 0.0
    %298 = vmatpush2.msra.mxu0 0.0
    %299 = vmatprep.subr.mxu0 0.0
    %300 = vmatpush2.msra.mxu0 0.0
    %301 = vmatprep.subr.mxu0 0.0
    %302 = vmatpush2.msra.mxu0 0.0
    %303 = vmatprep.subr.mxu0 0.0
    %304 = vmatpush2.msra.mxu0 0.0
    %305 = vmatprep.subr.mxu0 0.0
    %306 = vmatpush2.msra.mxu0 0.0
    %307 = vmatprep.subr.mxu0 0.0
    %308 = vmatpush2.msra.mxu0 0.0
    %309 = vmatprep.subr.mxu0 0.0
    %310 = vmatpush2.msra.mxu0 0.0
    %311 = vmatprep.subr.mxu0 0.0
    %312 = vmatpush2.msra.mxu0 0.0
    %313 = vmatprep.subr.mxu0 0.0
    %314 = vmatpush2.msra.mxu0 0.0
    %315 = vmatprep.subr.mxu0 0.0
    %316 = vmatpush2.msra.mxu0 0.0
    %317 = vmatprep.subr.mxu0 0.0
    %318 = vmatpush2.msra.mxu0 0.0
    %319 = vmatprep.subr.mxu0 0.0
    %320 = vmatpush2.msra.mxu0 0.0
    %321 = vmatprep.subr.mxu0 0.0
    %322 = vmatpush2.msra.mxu0 0.0
    %323 = vmatprep.subr.mxu0 0.0
    %324 = vmatpush2.msra.mxu0 0.0
    %325 = vmatprep.subr.mxu0 0.0
    %326 = vmatpush2.msra.mxu0 0.0
    %327 = vmatprep.mubr.f32.mxu0 0.0
    %328 = vmatmul.mubr.f32.gmra.mxu0 %v261
    %v329 = vpop.f32.mrf.mxu0
    %v330 = vadd.f32 %v260, %v329
    %v331 = vpop.f32.mrf.mxu0
    %332 = vdwg.mxu0
    %v333 = vtanh.pop %v330
    %v334 = vmul.f32 %v333, 0.5
    %v335 = vadd.f32 %v334, 0.5
    %v336 = vmul.f32 %v335, %v246
    %338 = vrot.lane.b32.xlu0 %v333, 64
    %v339 = vpop.permute.xlu0 %338
    %v341 = vmul.f32 %v335, %v339
    %343 = vrot.lane.b32.xlu0 %v341, 32
    %v344 = vpop.permute.xlu0 %343
    %v346 = vadd.f32 %v336, %v344
    %v347 = vtanh.pop %v346
    %349 = vrot.lane.b32.xlu0 %v347, 64
    %v350 = vpop.permute.xlu0 %349
    %v352 = vmul.f32 %v335, %v350
    %354 = vrot.lane.b32.xlu0 %v352, 32
    %v355 = vpop.permute.xlu0 %354
    %s357 = scalar_lea.vmem [#allocation8], 16
    %358 = vst.msk [vmem:[%s357] sm:$0xff] %vm60, %v355
    %s359 = scalar_lea.vmem [#allocation2], 24
    %v360 = vld [vmem:[%s359] sm:$0xff]
    %v361 = vsel %vm60, %v355, 0
    %363 = vmatprep.subr.mxu0 0.0
    %364 = vmatpush1.msra.mxu0 0.0
    %365 = vmatprep.subr.mxu0 0.0
    %366 = vmatpush1.msra.mxu0 0.0
    %367 = vmatprep.subr.mxu0 0.0
    %368 = vmatpush1.msra.mxu0 0.0
    %369 = vmatprep.subr.mxu0 0.0
    %370 = vmatpush1.msra.mxu0 0.0
    %371 = vmatprep.subr.mxu0 0.0
    %372 = vmatpush1.msra.mxu0 0.0
    %373 = vmatprep.subr.mxu0 0.0
    %374 = vmatpush1.msra.mxu0 0.0
    %375 = vmatprep.subr.mxu0 0.0
    %376 = vmatpush1.msra.mxu0 0.0
    %377 = vmatprep.subr.mxu0 0.0
    %378 = vmatpush1.msra.mxu0 0.0
    %379 = vmatprep.subr.mxu0 0.0
    %380 = vmatpush1.msra.mxu0 0.0
    %381 = vmatprep.subr.mxu0 0.0
    %382 = vmatpush1.msra.mxu0 0.0
    %383 = vmatprep.subr.mxu0 0.0
    %384 = vmatpush1.msra.mxu0 0.0
    %385 = vmatprep.subr.mxu0 0.0
    %386 = vmatpush1.msra.mxu0 0.0
    %387 = vmatprep.subr.mxu0 0.0
    %388 = vmatpush1.msra.mxu0 %v57
    %389 = vmatprep.subr.mxu0 0.0
    %390 = vmatpush1.msra.mxu0 %v56
    %391 = vmatprep.subr.mxu0 0.0
    %392 = vmatpush1.msra.mxu0 %v55
    %393 = vmatprep.subr.mxu0 0.0
    %394 = vmatpush1.msra.mxu0 %v54
    %395 = vmatprep.subr.mxu0 0.0
    %396 = vmatpush2.msra.mxu0 0.0
    %397 = vmatprep.subr.mxu0 0.0
    %398 = vmatpush2.msra.mxu0 0.0
    %399 = vmatprep.subr.mxu0 0.0
    %400 = vmatpush2.msra.mxu0 0.0
    %401 = vmatprep.subr.mxu0 0.0
    %402 = vmatpush2.msra.mxu0 0.0
    %403 = vmatprep.subr.mxu0 0.0
    %404 = vmatpush2.msra.mxu0 0.0
    %405 = vmatprep.subr.mxu0 0.0
    %406 = vmatpush2.msra.mxu0 0.0
    %407 = vmatprep.subr.mxu0 0.0
    %408 = vmatpush2.msra.mxu0 0.0
    %409 = vmatprep.subr.mxu0 0.0
    %410 = vmatpush2.msra.mxu0 0.0
    %411 = vmatprep.subr.mxu0 0.0
    %412 = vmatpush2.msra.mxu0 0.0
    %413 = vmatprep.subr.mxu0 0.0
    %414 = vmatpush2.msra.mxu0 0.0
    %415 = vmatprep.subr.mxu0 0.0
    %416 = vmatpush2.msra.mxu0 0.0
    %417 = vmatprep.subr.mxu0 0.0
    %418 = vmatpush2.msra.mxu0 0.0
    %419 = vmatprep.subr.mxu0 0.0
    %420 = vmatpush2.msra.mxu0 0.0
    %421 = vmatprep.subr.mxu0 0.0
    %422 = vmatpush2.msra.mxu0 0.0
    %423 = vmatprep.subr.mxu0 0.0
    %424 = vmatpush2.msra.mxu0 0.0
    %425 = vmatprep.subr.mxu0 0.0
    %426 = vmatpush2.msra.mxu0 0.0
    %427 = vmatprep.mubr.f32.mxu0 0.0
    %428 = vmatmul.mubr.f32.gmra.mxu0 %v361
    %v429 = vpop.f32.mrf.mxu0
    %v430 = vadd.f32 %v360, %v429
    %v431 = vpop.f32.mrf.mxu0
    %432 = vdwg.mxu0
    %v433 = vtanh.pop %v430
    %v434 = vmul.f32 %v433, 0.5
    %v435 = vadd.f32 %v434, 0.5
    %v436 = vmul.f32 %v435, %v346
    %438 = vrot.lane.b32.xlu0 %v433, 64
    %v439 = vpop.permute.xlu0 %438
    %v441 = vmul.f32 %v435, %v439
    %443 = vrot.lane.b32.xlu0 %v441, 32
    %v444 = vpop.permute.xlu0 %443
    %v446 = vadd.f32 %v436, %v444
    %v447 = vtanh.pop %v446
    %449 = vrot.lane.b32.xlu0 %v447, 64
    %v450 = vpop.permute.xlu0 %449
    %v452 = vmul.f32 %v435, %v450
    %454 = vrot.lane.b32.xlu0 %v452, 32
    %v455 = vpop.permute.xlu0 %454
    %s457 = scalar_lea.vmem [#allocation8], 24
    %458 = vst.msk [vmem:[%s457] sm:$0xff] %vm60, %v455
    %s459 = scalar_lea.vmem [#allocation2], 32
    %v460 = vld [vmem:[%s459] sm:$0xff]
    %v461 = vsel %vm60, %v455, 0
    %463 = vmatprep.subr.mxu0 0.0
    %464 = vmatpush1.msra.mxu0 0.0
    %465 = vmatprep.subr.mxu0 0.0
    %466 = vmatpush1.msra.mxu0 0.0
    %467 = vmatprep.subr.mxu0 0.0
    %468 = vmatpush1.msra.mxu0 0.0
    %469 = vmatprep.subr.mxu0 0.0
    %470 = vmatpush1.msra.mxu0 0.0
    %471 = vmatprep.subr.mxu0 0.0
    %472 = vmatpush1.msra.mxu0 0.0
    %473 = vmatprep.subr.mxu0 0.0
    %474 = vmatpush1.msra.mxu0 0.0
    %475 = vmatprep.subr.mxu0 0.0
    %476 = vmatpush1.msra.mxu0 0.0
    %477 = vmatprep.subr.mxu0 0.0
    %478 = vmatpush1.msra.mxu0 0.0
    %479 = vmatprep.subr.mxu0 0.0
    %480 = vmatpush1.msra.mxu0 0.0
    %481 = vmatprep.subr.mxu0 0.0
    %482 = vmatpush1.msra.mxu0 0.0
    %483 = vmatprep.subr.mxu0 0.0
    %484 = vmatpush1.msra.mxu0 0.0
    %485 = vmatprep.subr.mxu0 0.0
    %486 = vmatpush1.msra.mxu0 0.0
    %487 = vmatprep.subr.mxu0 0.0
    %488 = vmatpush1.msra.mxu0 %v57
    %489 = vmatprep.subr.mxu0 0.0
    %490 = vmatpush1.msra.mxu0 %v56
    %491 = vmatprep.subr.mxu0 0.0
    %492 = vmatpush1.msra.mxu0 %v55
    %493 = vmatprep.subr.mxu0 0.0
    %494 = vmatpush1.msra.mxu0 %v54
    %495 = vmatprep.subr.mxu0 0.0
    %496 = vmatpush2.msra.mxu0 0.0
    %497 = vmatprep.subr.mxu0 0.0
    %498 = vmatpush2.msra.mxu0 0.0
    %499 = vmatprep.subr.mxu0 0.0
    %500 = vmatpush2.msra.mxu0 0.0
    %501 = vmatprep.subr.mxu0 0.0
    %502 = vmatpush2.msra.mxu0 0.0
    %503 = vmatprep.subr.mxu0 0.0
    %504 = vmatpush2.msra.mxu0 0.0
    %505 = vmatprep.subr.mxu0 0.0
    %506 = vmatpush2.msra.mxu0 0.0
    %507 = vmatprep.subr.mxu0 0.0
    %508 = vmatpush2.msra.mxu0 0.0
    %509 = vmatprep.subr.mxu0 0.0
    %510 = vmatpush2.msra.mxu0 0.0
    %511 = vmatprep.subr.mxu0 0.0
    %512 = vmatpush2.msra.mxu0 0.0
    %513 = vmatprep.subr.mxu0 0.0
    %514 = vmatpush2.msra.mxu0 0.0
    %515 = vmatprep.subr.mxu0 0.0
    %516 = vmatpush2.msra.mxu0 0.0
    %517 = vmatprep.subr.mxu0 0.0
    %518 = vmatpush2.msra.mxu0 0.0
    %519 = vmatprep.subr.mxu0 0.0
    %520 = vmatpush2.msra.mxu0 0.0
    %521 = vmatprep.subr.mxu0 0.0
    %522 = vmatpush2.msra.mxu0 0.0
    %523 = vmatprep.subr.mxu0 0.0
    %524 = vmatpush2.msra.mxu0 0.0
    %525 = vmatprep.subr.mxu0 0.0
    %526 = vmatpush2.msra.mxu0 0.0
    %527 = vmatprep.mubr.f32.mxu0 0.0
    %528 = vmatmul.mubr.f32.gmra.mxu0 %v461
    %v529 = vpop.f32.mrf.mxu0
    %v530 = vadd.f32 %v460, %v529
    %v531 = vpop.f32.mrf.mxu0
    %532 = vdwg.mxu0
    %v533 = vtanh.pop %v530
    %v534 = vmul.f32 %v533, 0.5
    %v535 = vadd.f32 %v534, 0.5
    %v536 = vmul.f32 %v535, %v446
    %538 = vrot.lane.b32.xlu0 %v533, 64
    %v539 = vpop.permute.xlu0 %538
    %v541 = vmul.f32 %v535, %v539
    %543 = vrot.lane.b32.xlu0 %v541, 32
    %v544 = vpop.permute.xlu0 %543
    %v546 = vadd.f32 %v536, %v544
    %v547 = vtanh.pop %v546
    %549 = vrot.lane.b32.xlu0 %v547, 64
    %v550 = vpop.permute.xlu0 %549
    %v552 = vmul.f32 %v535, %v550
    %554 = vrot.lane.b32.xlu0 %v552, 32
    %v555 = vpop.permute.xlu0 %554
    %s557 = scalar_lea.vmem [#allocation8], 32
    %558 = vst.msk [vmem:[%s557] sm:$0xff] %vm60, %v555
    %s559 = scalar_lea.vmem [#allocation2], 40
    %v560 = vld [vmem:[%s559] sm:$0xff]
    %v561 = vsel %vm60, %v555, 0
    %563 = vmatprep.subr.mxu0 0.0
    %564 = vmatpush1.msra.mxu0 0.0
    %565 = vmatprep.subr.mxu0 0.0
    %566 = vmatpush1.msra.mxu0 0.0
    %567 = vmatprep.subr.mxu0 0.0
    %568 = vmatpush1.msra.mxu0 0.0
    %569 = vmatprep.subr.mxu0 0.0
    %570 = vmatpush1.msra.mxu0 0.0
    %571 = vmatprep.subr.mxu0 0.0
    %572 = vmatpush1.msra.mxu0 0.0
    %573 = vmatprep.subr.mxu0 0.0
    %574 = vmatpush1.msra.mxu0 0.0
    %575 = vmatprep.subr.mxu0 0.0
    %576 = vmatpush1.msra.mxu0 0.0
    %577 = vmatprep.subr.mxu0 0.0
    %578 = vmatpush1.msra.mxu0 0.0
    %579 = vmatprep.subr.mxu0 0.0
    %580 = vmatpush1.msra.mxu0 0.0
    %581 = vmatprep.subr.mxu0 0.0
    %582 = vmatpush1.msra.mxu0 0.0
    %583 = vmatprep.subr.mxu0 0.0
    %584 = vmatpush1.msra.mxu0 0.0
    %585 = vmatprep.subr.mxu0 0.0
    %586 = vmatpush1.msra.mxu0 0.0
    %587 = vmatprep.subr.mxu0 0.0
    %588 = vmatpush1.msra.mxu0 %v57
    %589 = vmatprep.subr.mxu0 0.0
    %590 = vmatpush1.msra.mxu0 %v56
    %591 = vmatprep.subr.mxu0 0.0
    %592 = vmatpush1.msra.mxu0 %v55
    %593 = vmatprep.subr.mxu0 0.0
    %594 = vmatpush1.msra.mxu0 %v54
    %595 = vmatprep.subr.mxu0 0.0
    %596 = vmatpush2.msra.mxu0 0.0
    %597 = vmatprep.subr.mxu0 0.0
    %598 = vmatpush2.msra.mxu0 0.0
    %599 = vmatprep.subr.mxu0 0.0
    %600 = vmatpush2.msra.mxu0 0.0
    %601 = vmatprep.subr.mxu0 0.0
    %602 = vmatpush2.msra.mxu0 0.0
    %603 = vmatprep.subr.mxu0 0.0
    %604 = vmatpush2.msra.mxu0 0.0
    %605 = vmatprep.subr.mxu0 0.0
    %606 = vmatpush2.msra.mxu0 0.0
    %607 = vmatprep.subr.mxu0 0.0
    %608 = vmatpush2.msra.mxu0 0.0
    %609 = vmatprep.subr.mxu0 0.0
    %610 = vmatpush2.msra.mxu0 0.0
    %611 = vmatprep.subr.mxu0 0.0
    %612 = vmatpush2.msra.mxu0 0.0
    %613 = vmatprep.subr.mxu0 0.0
    %614 = vmatpush2.msra.mxu0 0.0
    %615 = vmatprep.subr.mxu0 0.0
    %616 = vmatpush2.msra.mxu0 0.0
    %617 = vmatprep.subr.mxu0 0.0
    %618 = vmatpush2.msra.mxu0 0.0
    %619 = vmatprep.subr.mxu0 0.0
    %620 = vmatpush2.msra.mxu0 0.0
    %621 = vmatprep.subr.mxu0 0.0
    %622 = vmatpush2.msra.mxu0 0.0
    %623 = vmatprep.subr.mxu0 0.0
    %624 = vmatpush2.msra.mxu0 0.0
    %625 = vmatprep.subr.mxu0 0.0
    %626 = vmatpush2.msra.mxu0 0.0
    %627 = vmatprep.mubr.f32.mxu0 0.0
    %628 = vmatmul.mubr.f32.gmra.mxu0 %v561
    %v629 = vpop.f32.mrf.mxu0
    %v630 = vadd.f32 %v560, %v629
    %v631 = vpop.f32.mrf.mxu0
    %632 = vdwg.mxu0
    %v633 = vtanh.pop %v630
    %v634 = vmul.f32 %v633, 0.5
    %v635 = vadd.f32 %v634, 0.5
    %v636 = vmul.f32 %v635, %v546
    %638 = vrot.lane.b32.xlu0 %v633, 64
    %v639 = vpop.permute.xlu0 %638
    %v641 = vmul.f32 %v635, %v639
    %643 = vrot.lane.b32.xlu0 %v641, 32
    %v644 = vpop.permute.xlu0 %643
    %v646 = vadd.f32 %v636, %v644
    %v647 = vtanh.pop %v646
    %649 = vrot.lane.b32.xlu0 %v647, 64
    %v650 = vpop.permute.xlu0 %649
    %v652 = vmul.f32 %v635, %v650
    %654 = vrot.lane.b32.xlu0 %v652, 32
    %v655 = vpop.permute.xlu0 %654
    %s657 = scalar_lea.vmem [#allocation8], 40
    %658 = vst.msk [vmem:[%s657] sm:$0xff] %vm60, %v655
    %s659 = scalar_lea.vmem [#allocation2], 48
    %v660 = vld [vmem:[%s659] sm:$0xff]
    %v661 = vsel %vm60, %v655, 0
    %663 = vmatprep.subr.mxu0 0.0
    %664 = vmatpush1.msra.mxu0 0.0
    %665 = vmatprep.subr.mxu0 0.0
    %666 = vmatpush1.msra.mxu0 0.0
    %667 = vmatprep.subr.mxu0 0.0
    %668 = vmatpush1.msra.mxu0 0.0
    %669 = vmatprep.subr.mxu0 0.0
    %670 = vmatpush1.msra.mxu0 0.0
    %671 = vmatprep.subr.mxu0 0.0
    %672 = vmatpush1.msra.mxu0 0.0
    %673 = vmatprep.subr.mxu0 0.0
    %674 = vmatpush1.msra.mxu0 0.0
    %675 = vmatprep.subr.mxu0 0.0
    %676 = vmatpush1.msra.mxu0 0.0
    %677 = vmatprep.subr.mxu0 0.0
    %678 = vmatpush1.msra.mxu0 0.0
    %679 = vmatprep.subr.mxu0 0.0
    %680 = vmatpush1.msra.mxu0 0.0
    %681 = vmatprep.subr.mxu0 0.0
    %682 = vmatpush1.msra.mxu0 0.0
    %683 = vmatprep.subr.mxu0 0.0
    %684 = vmatpush1.msra.mxu0 0.0
    %685 = vmatprep.subr.mxu0 0.0
    %686 = vmatpush1.msra.mxu0 0.0
    %687 = vmatprep.subr.mxu0 0.0
    %688 = vmatpush1.msra.mxu0 %v57
    %689 = vmatprep.subr.mxu0 0.0
    %690 = vmatpush1.msra.mxu0 %v56
    %691 = vmatprep.subr.mxu0 0.0
    %692 = vmatpush1.msra.mxu0 %v55
    %693 = vmatprep.subr.mxu0 0.0
    %694 = vmatpush1.msra.mxu0 %v54
    %695 = vmatprep.subr.mxu0 0.0
    %696 = vmatpush2.msra.mxu0 0.0
    %697 = vmatprep.subr.mxu0 0.0
    %698 = vmatpush2.msra.mxu0 0.0
    %699 = vmatprep.subr.mxu0 0.0
    %700 = vmatpush2.msra.mxu0 0.0
    %701 = vmatprep.subr.mxu0 0.0
    %702 = vmatpush2.msra.mxu0 0.0
    %703 = vmatprep.subr.mxu0 0.0
    %704 = vmatpush2.msra.mxu0 0.0
    %705 = vmatprep.subr.mxu0 0.0
    %706 = vmatpush2.msra.mxu0 0.0
    %707 = vmatprep.subr.mxu0 0.0
    %708 = vmatpush2.msra.mxu0 0.0
    %709 = vmatprep.subr.mxu0 0.0
    %710 = vmatpush2.msra.mxu0 0.0
    %711 = vmatprep.subr.mxu0 0.0
    %712 = vmatpush2.msra.mxu0 0.0
    %713 = vmatprep.subr.mxu0 0.0
    %714 = vmatpush2.msra.mxu0 0.0
    %715 = vmatprep.subr.mxu0 0.0
    %716 = vmatpush2.msra.mxu0 0.0
    %717 = vmatprep.subr.mxu0 0.0
    %718 = vmatpush2.msra.mxu0 0.0
    %719 = vmatprep.subr.mxu0 0.0
    %720 = vmatpush2.msra.mxu0 0.0
    %721 = vmatprep.subr.mxu0 0.0
    %722 = vmatpush2.msra.mxu0 0.0
    %723 = vmatprep.subr.mxu0 0.0
    %724 = vmatpush2.msra.mxu0 0.0
    %725 = vmatprep.subr.mxu0 0.0
    %726 = vmatpush2.msra.mxu0 0.0
    %727 = vmatprep.mubr.f32.mxu0 0.0
    %728 = vmatmul.mubr.f32.gmra.mxu0 %v661
    %v729 = vpop.f32.mrf.mxu0
    %v730 = vadd.f32 %v660, %v729
    %v731 = vpop.f32.mrf.mxu0
    %732 = vdwg.mxu0
    %v733 = vtanh.pop %v730
    %v734 = vmul.f32 %v733, 0.5
    %v735 = vadd.f32 %v734, 0.5
    %v736 = vmul.f32 %v735, %v646
    %738 = vrot.lane.b32.xlu0 %v733, 64
    %v739 = vpop.permute.xlu0 %738
    %v741 = vmul.f32 %v735, %v739
    %743 = vrot.lane.b32.xlu0 %v741, 32
    %v744 = vpop.permute.xlu0 %743
    %v746 = vadd.f32 %v736, %v744
    %v747 = vtanh.pop %v746
    %749 = vrot.lane.b32.xlu0 %v747, 64
    %v750 = vpop.permute.xlu0 %749
    %v752 = vmul.f32 %v735, %v750
    %754 = vrot.lane.b32.xlu0 %v752, 32
    %v755 = vpop.permute.xlu0 %754
    %s757 = scalar_lea.vmem [#allocation8], 48
    %758 = vst.msk [vmem:[%s757] sm:$0xff] %vm60, %v755
    %s759 = scalar_lea.vmem [#allocation2], 56
    %v760 = vld [vmem:[%s759] sm:$0xff]
    %v761 = vsel %vm60, %v755, 0
    %763 = vmatprep.subr.mxu0 0.0
    %764 = vmatpush1.msra.mxu0 0.0
    %765 = vmatprep.subr.mxu0 0.0
    %766 = vmatpush1.msra.mxu0 0.0
    %767 = vmatprep.subr.mxu0 0.0
    %768 = vmatpush1.msra.mxu0 0.0
    %769 = vmatprep.subr.mxu0 0.0
    %770 = vmatpush1.msra.mxu0 0.0
    %771 = vmatprep.subr.mxu0 0.0
    %772 = vmatpush1.msra.mxu0 0.0
    %773 = vmatprep.subr.mxu0 0.0
    %774 = vmatpush1.msra.mxu0 0.0
    %775 = vmatprep.subr.mxu0 0.0
    %776 = vmatpush1.msra.mxu0 0.0
    %777 = vmatprep.subr.mxu0 0.0
    %778 = vmatpush1.msra.mxu0 0.0
    %779 = vmatprep.subr.mxu0 0.0
    %780 = vmatpush1.msra.mxu0 0.0
    %781 = vmatprep.subr.mxu0 0.0
    %782 = vmatpush1.msra.mxu0 0.0
    %783 = vmatprep.subr.mxu0 0.0
    %784 = vmatpush1.msra.mxu0 0.0
    %785 = vmatprep.subr.mxu0 0.0
    %786 = vmatpush1.msra.mxu0 0.0
    %787 = vmatprep.subr.mxu0 0.0
    %788 = vmatpush1.msra.mxu0 %v57
    %789 = vmatprep.subr.mxu0 0.0
    %790 = vmatpush1.msra.mxu0 %v56
    %791 = vmatprep.subr.mxu0 0.0
    %792 = vmatpush1.msra.mxu0 %v55
    %793 = vmatprep.subr.mxu0 0.0
    %794 = vmatpush1.msra.mxu0 %v54
    %795 = vmatprep.subr.mxu0 0.0
    %796 = vmatpush2.msra.mxu0 0.0
    %797 = vmatprep.subr.mxu0 0.0
    %798 = vmatpush2.msra.mxu0 0.0
    %799 = vmatprep.subr.mxu0 0.0
    %800 = vmatpush2.msra.mxu0 0.0
    %801 = vmatprep.subr.mxu0 0.0
    %802 = vmatpush2.msra.mxu0 0.0
    %803 = vmatprep.subr.mxu0 0.0
    %804 = vmatpush2.msra.mxu0 0.0
    %805 = vmatprep.subr.mxu0 0.0
    %806 = vmatpush2.msra.mxu0 0.0
    %807 = vmatprep.subr.mxu0 0.0
    %808 = vmatpush2.msra.mxu0 0.0
    %809 = vmatprep.subr.mxu0 0.0
    %810 = vmatpush2.msra.mxu0 0.0
    %811 = vmatprep.subr.mxu0 0.0
    %812 = vmatpush2.msra.mxu0 0.0
    %813 = vmatprep.subr.mxu0 0.0
    %814 = vmatpush2.msra.mxu0 0.0
    %815 = vmatprep.subr.mxu0 0.0
    %816 = vmatpush2.msra.mxu0 0.0
    %817 = vmatprep.subr.mxu0 0.0
    %818 = vmatpush2.msra.mxu0 0.0
    %819 = vmatprep.subr.mxu0 0.0
    %820 = vmatpush2.msra.mxu0 0.0
    %821 = vmatprep.subr.mxu0 0.0
    %822 = vmatpush2.msra.mxu0 0.0
    %823 = vmatprep.subr.mxu0 0.0
    %824 = vmatpush2.msra.mxu0 0.0
    %825 = vmatprep.subr.mxu0 0.0
    %826 = vmatpush2.msra.mxu0 0.0
    %827 = vmatprep.mubr.f32.mxu0 0.0
    %828 = vmatmul.mubr.f32.gmra.mxu0 %v761
    %v829 = vpop.f32.mrf.mxu0
    %v830 = vadd.f32 %v760, %v829
    %v831 = vpop.f32.mrf.mxu0
    %832 = vdwg.mxu0
    %v833 = vtanh.pop %v830
    %v834 = vmul.f32 %v833, 0.5
    %v835 = vadd.f32 %v834, 0.5
    %v836 = vmul.f32 %v835, %v746
    %838 = vrot.lane.b32.xlu0 %v833, 64
    %v839 = vpop.permute.xlu0 %838
    %v841 = vmul.f32 %v835, %v839
    %843 = vrot.lane.b32.xlu0 %v841, 32
    %v844 = vpop.permute.xlu0 %843
    %v846 = vadd.f32 %v836, %v844
    %v847 = vtanh.pop %v846
    %849 = vrot.lane.b32.xlu0 %v847, 64
    %v850 = vpop.permute.xlu0 %849
    %v852 = vmul.f32 %v835, %v850
    %854 = vrot.lane.b32.xlu0 %v852, 32
    %v855 = vpop.permute.xlu0 %854
    %s857 = scalar_lea.vmem [#allocation8], 56
    %858 = vst.msk [vmem:[%s857] sm:$0xff] %vm60, %v855
    // Predicated region
    $region26: #{tpu_custom_call.1} parent=1 // pred_check
      _
    $region27: #{tpu_custom_call.1} parent=1 // pred_check_branch
      %860 = sbr.rel (0) target = $region29
    $region28: #{tpu_custom_call.1} parent=1 // pred_region
      %s862 = ssub.s32 1024, 1024
      %863 = vsyncadd [#allocation4], %s862
      %s864 = sshll.u32 [#allocation8], 4
      %s865 = int_to_ptr.vmem [resolvable:$true] %s864
      %870 = dma.vmem_to_hbm [thread:$0]  %s865, 1024, %s3, [#allocation4], 128, 128, 8
    $region29: #{tpu_custom_call.1} parent=1 // pred_fallthru
      _
    // Predicated region
    $region30: #{tpu_custom_call.1} parent=1 // pred_check
      _
    $region31: #{tpu_custom_call.1} parent=1 // pred_check_branch
      %872 = sbr.rel (0) target = $region33
    $region32: #{tpu_custom_call.1} parent=1 // pred_region
      %873 = dma.done [#allocation4], 1024
    $region33: #{tpu_custom_call.1} parent=1 // pred_fallthru
      _
    %874 = vsyncpa [#allocation3], 1
    %875 = vsyncpa [#allocation6], 1
    %876 = vsyncpa [#allocation4], 1

</llo_original>
